<compile_context>
chip_gen: v7x
topology: tpu7x:2x2x1
jax: 0.10.0
libtpu: 0.0.40
codegen_flags: <defaults>
</compile_context>

<pallas_src>
import jax
import jax.numpy as jnp
from jax import lax
from jax.experimental import pallas as pl
from jax.experimental.pallas import tpu as pltpu


def _round_up(n, m):
    return ((n + m - 1) // m) * m


def discriminator_kernel(x_ref, a_ref, w1x_ref, w1a_ref, b1_ref, w2t_ref,
                         b2_ref, o_ref):
    # fc1 on the logical [x, a] input, expressed as two MXU matmuls so the
    # concat never has to materialize: h = x @ W1x + a @ W1a + b1.
    h = jnp.dot(x_ref[...], w1x_ref[...], preferred_element_type=jnp.float32)
    h = h + jnp.dot(a_ref[...], w1a_ref[...], preferred_element_type=jnp.float32)
    h = jnp.maximum(h + b1_ref[...], 0.0)                       # ReLU (VPU)
    # fc2 with a lane-dense (1, TB) result: contract the hidden axis of
    # (1, hidden) against the hidden axis of (TB, hidden)  ->  (1, TB).
    logits = lax.dot_general(
        w2t_ref[...], h,
        dimension_numbers=(((1,), (1,)), ((), ())),
        preferred_element_type=jnp.float32) + b2_ref[0, 0]
    o_ref[...] = jax.nn.sigmoid(logits).astype(o_ref.dtype)     # EUP


def discriminator_forward(x, a, params, *, block_rows=1024):
    """x: (B, state_dim), a: (B, action_dim) -> (B, 1) float32 probabilities."""
    w1, b1, w2t, b2 = params
    B, state_dim = x.shape
    action_dim = a.shape[1]
    in_dim, hidden = w1.shape
    assert in_dim == state_dim + action_dim

    x = x.astype(jnp.float32)
    a = a.astype(jnp.float32)
    # One-time tiny slices of the fused fc1 weight (stays layout-compatible
    # with a concatenated input while letting the kernel skip the concat).
    w1x = w1[:state_dim, :]
    w1a = w1[state_dim:, :]

    # Batch tile: multiple of 128 so the (1, TB) output block is lane-dense.
    tb = min(_round_up(block_rows, 128), _round_up(B, 128))
    bp = _round_up(B, tb)
    num_tiles = bp // tb
    if bp != B:
        pad = bp - B
        x = jnp.pad(x, ((0, pad), (0, 0)))     # ragged tail: pad, slice later
        a = jnp.pad(a, ((0, pad), (0, 0)))

    out = pl.pallas_call(
        discriminator_kernel,
        out_shape=jax.ShapeDtypeStruct((1, bp), jnp.float32),
        grid=(num_tiles,),
        in_specs=[
            pl.BlockSpec((tb, state_dim), lambda i: (i, 0)),       # x tile
            pl.BlockSpec((tb, action_dim), lambda i: (i, 0)),      # a tile
            pl.BlockSpec((state_dim, hidden), lambda i: (0, 0)),   # W1x (resident)
            pl.BlockSpec((action_dim, hidden), lambda i: (0, 0)),  # W1a (resident)
            pl.BlockSpec((1, hidden), lambda i: (0, 0)),           # b1 (resident)
            pl.BlockSpec((1, hidden), lambda i: (0, 0)),           # W2^T (resident)
            pl.BlockSpec(memory_space=pltpu.MemorySpace.SMEM),     # b2 scalar
        ],
        out_specs=pl.BlockSpec((1, tb), lambda i: (0, i)),         # lane-dense out
        compiler_params=pltpu.CompilerParams(
            dimension_semantics=("parallel",)),                    # 2 TCs on v7x
    )(x, a, w1x, w1a, b1, w2t, b2)

    return out[0, :B].reshape(B, 1)


def init_params(key, state_dim, hidden_dim, action_dim):
    """Deterministic init mimicking PyTorch nn.Linear (uniform +/- 1/sqrt(fan_in))."""
    in_dim = state_dim + action_dim
    k1, k2, k3, k4 = jax.random.split(key, 4)
    bound1 = 1.0 / jnp.sqrt(in_dim)
    bound2 = 1.0 / jnp.sqrt(hidden_dim)
    w1 = jax.random.uniform(k1, (in_dim, hidden_dim), jnp.float32, -bound1, bound1)
    b1 = jax.random.uniform(k2, (1, hidden_dim), jnp.float32, -bound1, bound1)
    w2t = jax.random.uniform(k3, (1, hidden_dim), jnp.float32, -bound2, bound2)
    b2 = jax.random.uniform(k4, (1, 1), jnp.float32, -bound2, bound2)
    return (w1, b1, w2t, b2)


def reference_forward(x, a, params):
    """Pure-JAX reference for correctness check."""
    w1, b1, w2t, b2 = params
    cat = jnp.concatenate([x, a], axis=1)
    h = jax.nn.relu(cat @ w1 + b1)
    return jax.nn.sigmoid(h @ w2t.T + b2)


if __name__ == "__main__":
    state_dim, hidden_dim, action_dim = 12, 32, 4
    batch = 2

    key = jax.random.PRNGKey(0)
    kp, kx, ka = jax.random.split(key, 3)
    params = init_params(kp, state_dim, hidden_dim, action_dim)
    x = jax.random.normal(kx, (batch, state_dim), jnp.float32)
    a = jax.random.normal(ka, (batch, action_dim), jnp.float32)

    out = jax.block_until_ready(discriminator_forward(x, a, params))
    ref = reference_forward(x, a, params)
    assert out.shape == (batch, 1)
    assert jnp.allclose(out, ref, atol=1e-5, rtol=1e-5)

    # Larger multi-tile batch: exercises the grid, resident weights and the
    # ragged-tail padding path.
    big = 2048 + 37
    kx2, ka2 = jax.random.split(jax.random.PRNGKey(1))
    xb = jax.random.normal(kx2, (big, state_dim), jnp.float32)
    ab = jax.random.normal(ka2, (big, action_dim), jnp.float32)
    out_b = jax.block_until_ready(
        discriminator_forward(xb, ab, params, block_rows=512))
    ref_b = reference_forward(xb, ab, params)
    assert out_b.shape == (big, 1)
    assert jnp.allclose(out_b, ref_b, atol=1e-5, rtol=1e-5)

    print("KERNEL_OK")
</pallas_src>

<mosaic_0001>
module attributes {stable_mosaic.version = 11 : i64} {
  func.func @discriminator_kernel(%arg0: i32, %arg1: memref<128x12xf32, #tpu.memory_space<vmem>>, %arg2: memref<128x4xf32, #tpu.memory_space<vmem>>, %arg3: memref<12x32xf32, #tpu.memory_space<vmem>>, %arg4: memref<4x32xf32, #tpu.memory_space<vmem>>, %arg5: memref<1x32xf32, #tpu.memory_space<vmem>>, %arg6: memref<1x32xf32, #tpu.memory_space<vmem>>, %arg7: memref<1x1xf32, #tpu.memory_space<smem>>, %arg8: memref<1x128xf32, #tpu.memory_space<vmem>>) attributes {dimension_semantics = [#tpu.dimension_semantics<parallel>], iteration_bounds = array<i64: 1>, scalar_prefetch = 0 : i64, scratch_operands = 0 : i64, tpu.core_type = #tpu.core_type<tc>, window_params = [{transform_indices = @transform_0, window_bounds = array<i64: 128, 12>}, {transform_indices = @transform_1, window_bounds = array<i64: 128, 4>}, {pipeline_mode = #tpu.pipeline_mode<synchronous>, transform_indices = @transform_2, window_bounds = array<i64: 12, 32>}, {pipeline_mode = #tpu.pipeline_mode<synchronous>, transform_indices = @transform_3, window_bounds = array<i64: 4, 32>}, {pipeline_mode = #tpu.pipeline_mode<synchronous>, transform_indices = @transform_4, window_bounds = array<i64: 1, 32>}, {pipeline_mode = #tpu.pipeline_mode<synchronous>, transform_indices = @transform_5, window_bounds = array<i64: 1, 32>}, {transform_indices = @transform_6, window_bounds = array<i64: 1, 1>}, {transform_indices = @transform_7, window_bounds = array<i64: 1, 128>}]} {
    %c0 = arith.constant 0 : index
    %c0_0 = arith.constant 0 : index
    %0 = vector.load %arg1[%c0, %c0_0] : memref<128x12xf32, #tpu.memory_space<vmem>>, vector<128x12xf32>
    %c0_1 = arith.constant 0 : index
    %c0_2 = arith.constant 0 : index
    %1 = vector.load %arg3[%c0_1, %c0_2] : memref<12x32xf32, #tpu.memory_space<vmem>>, vector<12x32xf32>
    %cst = arith.constant dense<0.000000e+00> : vector<128x32xf32>
    %2 = tpu.matmul %0, %1, %cst {dimension_numbers = #tpu.dot_dimension_numbers<[1], [0], [0], [1], [0, 0, 1, 1], [], []>} : vector<128x12xf32>, vector<12x32xf32>, vector<128x32xf32> -> vector<128x32xf32>
    %c0_3 = arith.constant 0 : index
    %c0_4 = arith.constant 0 : index
    %3 = vector.load %arg2[%c0_3, %c0_4] : memref<128x4xf32, #tpu.memory_space<vmem>>, vector<128x4xf32>
    %c0_5 = arith.constant 0 : index
    %c0_6 = arith.constant 0 : index
    %4 = vector.load %arg4[%c0_5, %c0_6] : memref<4x32xf32, #tpu.memory_space<vmem>>, vector<4x32xf32>
    %cst_7 = arith.constant dense<0.000000e+00> : vector<128x32xf32>
    %5 = tpu.matmul %3, %4, %cst_7 {dimension_numbers = #tpu.dot_dimension_numbers<[1], [0], [0], [1], [0, 0, 1, 1], [], []>} : vector<128x4xf32>, vector<4x32xf32>, vector<128x32xf32> -> vector<128x32xf32>
    %6 = arith.addf %2, %5 : vector<128x32xf32>
    %c0_8 = arith.constant 0 : index
    %c0_9 = arith.constant 0 : index
    %7 = vector.load %arg5[%c0_8, %c0_9] : memref<1x32xf32, #tpu.memory_space<vmem>>, vector<1x32xf32>
    %8 = vector.broadcast %7 : vector<1x32xf32> to vector<128x32xf32>
    %9 = arith.addf %6, %8 : vector<128x32xf32>
    %cst_10 = arith.constant 0.000000e+00 : f32
    %10 = vector.broadcast %cst_10 : f32 to vector<128x32xf32>
    %11 = arith.maximumf %9, %10 : vector<128x32xf32>
    %c0_11 = arith.constant 0 : index
    %c0_12 = arith.constant 0 : index
    %12 = vector.load %arg6[%c0_11, %c0_12] : memref<1x32xf32, #tpu.memory_space<vmem>>, vector<1x32xf32>
    %cst_13 = arith.constant dense<0.000000e+00> : vector<1x128xf32>
    %13 = tpu.matmul %12, %11, %cst_13 {dimension_numbers = #tpu.dot_dimension_numbers<[1], [1], [0], [0], [0, 0, 1, 0], [], []>} : vector<1x32xf32>, vector<128x32xf32>, vector<1x128xf32> -> vector<1x128xf32>
    %c0_14 = arith.constant 0 : index
    %c0_15 = arith.constant 0 : index
    %14 = memref.load %arg7[%c0_14, %c0_15] : memref<1x1xf32, #tpu.memory_space<smem>>
    %15 = vector.broadcast %14 : f32 to vector<1x128xf32>
    %16 = arith.addf %13, %15 : vector<1x128xf32>
    %17 = arith.negf %16 : vector<1x128xf32>
    %18 = math.exp %17 : vector<1x128xf32>
    %cst_16 = arith.constant 1.000000e+00 : f32
    %19 = vector.broadcast %cst_16 : f32 to vector<1x128xf32>
    %20 = arith.addf %19, %18 : vector<1x128xf32>
    %21 = arith.divf %19, %20 : vector<1x128xf32>
    %c0_17 = arith.constant 0 : index
    %c0_18 = arith.constant 0 : index
    %22 = vector.load %arg8[%c0_17, %c0_18] : memref<1x128xf32, #tpu.memory_space<vmem>>, vector<1x128xf32>
    tpu.vector_store %arg8[%c0_17, %c0_18], %21 {strides = array<i32>} : memref<1x128xf32, #tpu.memory_space<vmem>>, vector<1x128xf32>,
    return
  }
  func.func @transform_0(%arg0: i32) -> (i32, i32) {
    %c0_i32 = arith.constant 0 : i32
    %c0_i32_0 = arith.constant 0 : i32
    return %arg0, %c0_i32 : i32, i32
  }
  func.func @transform_1(%arg0: i32) -> (i32, i32) {
    %c0_i32 = arith.constant 0 : i32
    %c0_i32_0 = arith.constant 0 : i32
    return %arg0, %c0_i32 : i32, i32
  }
  func.func @transform_2(%arg0: i32) -> (i32, i32) {
    %c0_i32 = arith.constant 0 : i32
    %c0_i32_0 = arith.constant 0 : i32
    %c0_i32_1 = arith.constant 0 : i32
    return %c0_i32, %c0_i32_0 : i32, i32
  }
  func.func @transform_3(%arg0: i32) -> (i32, i32) {
    %c0_i32 = arith.constant 0 : i32
    %c0_i32_0 = arith.constant 0 : i32
    %c0_i32_1 = arith.constant 0 : i32
    return %c0_i32, %c0_i32_0 : i32, i32
  }
  func.func @transform_4(%arg0: i32) -> (i32, i32) {
    %c0_i32 = arith.constant 0 : i32
    %c0_i32_0 = arith.constant 0 : i32
    %c0_i32_1 = arith.constant 0 : i32
    return %c0_i32, %c0_i32_0 : i32, i32
  }
  func.func @transform_5(%arg0: i32) -> (i32, i32) {
    %c0_i32 = arith.constant 0 : i32
    %c0_i32_0 = arith.constant 0 : i32
    %c0_i32_1 = arith.constant 0 : i32
    return %c0_i32, %c0_i32_0 : i32, i32
  }
  func.func @transform_6(%arg0: i32) -> (i32, i32) {
    %c0_i32 = arith.constant 0 : i32
    %c0_i32_0 = arith.constant 0 : i32
    %c0_i32_1 = arith.constant 0 : i32
    return %c0_i32, %c0_i32_0 : i32, i32
  }
  func.func @transform_7(%arg0: i32) -> (i32, i32) {
    %c0_i32 = arith.constant 0 : i32
    %c0_i32_0 = arith.constant 0 : i32
    return %c0_i32, %arg0 : i32, i32
  }
}

</mosaic_0001>

<llo_original>
// kernel: tpu_custom_call.1
$region0: #{tpu_custom_call.1}
  #allocation0 [shape = 'u32[]', space=smem, size = 0x4, offset = 0x4, fixed_abs, tag = 'smem constant byte address 0x4 - core index']
  #allocation1 [shape = 'u32[144,128]{1,0:T(1,128)}', space=vmem, size = 0x12000, scoped, tag = 'internal scratch']
  #allocation2 [shape = 'f32[1,1]{1,0:T(1,128)S(6)}', space=smem, size = 0x200, scoped, tag = 'scoped memory for tpu_custom_call.1']
  %s0 = inlined_call_operand.vmem [shape: f32[128,12], index: 0, kind: input, shape index: {}]
  %s1 = inlined_call_operand.vmem [shape: f32[128,4], index: 1, kind: input, shape index: {}]
  %s2 = inlined_call_operand.vmem [shape: f32[12,32], index: 2, kind: input, shape index: {}]
  %s3 = inlined_call_operand.vmem [shape: f32[4,32], index: 3, kind: input, shape index: {}]
  %s4 = inlined_call_operand.vmem [shape: f32[1,32], index: 4, kind: input, shape index: {}]
  %s5 = inlined_call_operand.vmem [shape: f32[1,32], index: 5, kind: input, shape index: {}]
  %s6 = inlined_call_operand.<no memory space> [shape: f32[1,1], index: 6, kind: input, shape index: {}]
  %s7 = inlined_call_operand.hbm [shape: f32[1,128], index: 7, kind: output, shape index: {}]
  %s8 = sld [smem:[#allocation0]]
  $region38: #{tpu_custom_call.1} parent=0
    _
  %s10 = ssub.s32 1, %s8
  %s11 = scalar_select 0, %s10, %s8
  %12 = sst [smem:[#allocation2]] %s6
  $region1: #{tpu_custom_call.1} parent=0
    #allocation3 [shape = 'u8[512]{0}', space=vmem, size = 0x400, scoped, tag = 'output window, operand 0, single buffered']
    #allocation4 [shape = 's32[1]{0}', space=sflag, size = 0x4, scoped, tag = 'scoped memory for tpu_custom_call.1']
    %13 = vsyncpa [#allocation4], 0
    // Predicated region
    $region2: #{tpu_custom_call.1} parent=1 // pred_check
      _
    $region3: #{tpu_custom_call.1} parent=1 // pred_check_branch
      %15 = sbr.rel (0) target = $region5
    $region4: #{tpu_custom_call.1} parent=1 // pred_region
      _
    $region5: #{tpu_custom_call.1} parent=1 // pred_fallthru
      _
    // Predicated region
    $region6: #{tpu_custom_call.1} parent=1 // pred_check
      _
    $region7: #{tpu_custom_call.1} parent=1 // pred_check_branch
      %17 = sbr.rel (0) target = $region9
    $region8: #{tpu_custom_call.1} parent=1 // pred_region
      _
    $region9: #{tpu_custom_call.1} parent=1 // pred_fallthru
      _
    // Predicated region
    $region10: #{tpu_custom_call.1} parent=1 // pred_check
      _
    $region11: #{tpu_custom_call.1} parent=1 // pred_check_branch
      %19 = sbr.rel (0) target = $region13
    $region12: #{tpu_custom_call.1} parent=1 // pred_region
      _
    $region13: #{tpu_custom_call.1} parent=1 // pred_fallthru
      _
    // Predicated region
    $region14: #{tpu_custom_call.1} parent=1 // pred_check
      _
    $region15: #{tpu_custom_call.1} parent=1 // pred_check_branch
      %21 = sbr.rel (0) target = $region17
    $region16: #{tpu_custom_call.1} parent=1 // pred_region
      _
    $region17: #{tpu_custom_call.1} parent=1 // pred_fallthru
      _
    // Predicated region
    $region18: #{tpu_custom_call.1} parent=1 // pred_check
      _
    $region19: #{tpu_custom_call.1} parent=1 // pred_check_branch
      %23 = sbr.rel (0) target = $region21
    $region20: #{tpu_custom_call.1} parent=1 // pred_region
      _
    $region21: #{tpu_custom_call.1} parent=1 // pred_fallthru
      _
    // Predicated region
    $region22: #{tpu_custom_call.1} parent=1 // pred_check
      _
    $region23: #{tpu_custom_call.1} parent=1 // pred_check_branch
      %25 = sbr.rel (0) target = $region25
    $region24: #{tpu_custom_call.1} parent=1 // pred_region
      _
    $region25: #{tpu_custom_call.1} parent=1 // pred_fallthru
      _
    // Predicated region
    $region26: #{tpu_custom_call.1} parent=1 // pred_check
      _
    $region27: #{tpu_custom_call.1} parent=1 // pred_check_branch
      %27 = sbr.rel (0) target = $region29
    $region28: #{tpu_custom_call.1} parent=1 // pred_region
      _
    $region29: #{tpu_custom_call.1} parent=1 // pred_fallthru
      _
    %v28 = vld [vmem:[%s0] sm:$0xff]
    %v29 = vld [vmem:[%s0 + $0x8] sm:$0xff]
    %v30 = vld [vmem:[%s0 + $0x10] sm:$0xff]
    %v31 = vld [vmem:[%s0 + $0x18] sm:$0xff]
    %v32 = vld [vmem:[%s0 + $0x20] sm:$0xff]
    %v33 = vld [vmem:[%s0 + $0x28] sm:$0xff]
    %v34 = vld [vmem:[%s0 + $0x30] sm:$0xff]
    %v35 = vld [vmem:[%s0 + $0x38] sm:$0xff]
    %v36 = vld [vmem:[%s0 + $0x40] sm:$0xff]
    %v37 = vld [vmem:[%s0 + $0x48] sm:$0xff]
    %v38 = vld [vmem:[%s0 + $0x50] sm:$0xff]
    %v39 = vld [vmem:[%s0 + $0x58] sm:$0xff]
    %v40 = vld [vmem:[%s0 + $0x60] sm:$0xff]
    %v41 = vld [vmem:[%s0 + $0x68] sm:$0xff]
    %v42 = vld [vmem:[%s0 + $0x70] sm:$0xff]
    %v43 = vld [vmem:[%s0 + $0x78] sm:$0xff]
    %v44 = vld [vmem:[%s2] sm:$0xff]
    %v45 = vld [vmem:[%s2 + $0x8] sm:$0xf]
    %v46 = vld [vmem:[%s1] sm:$0xff]
    %v47 = vld [vmem:[%s1 + $0x8] sm:$0xff]
    %v48 = vld [vmem:[%s1 + $0x10] sm:$0xff]
    %v49 = vld [vmem:[%s1 + $0x18] sm:$0xff]
    %v50 = vld [vmem:[%s1 + $0x20] sm:$0xff]
    %v51 = vld [vmem:[%s1 + $0x28] sm:$0xff]
    %v52 = vld [vmem:[%s1 + $0x30] sm:$0xff]
    %v53 = vld [vmem:[%s1 + $0x38] sm:$0xff]
    %v54 = vld [vmem:[%s1 + $0x40] sm:$0xff]
    %v55 = vld [vmem:[%s1 + $0x48] sm:$0xff]
    %v56 = vld [vmem:[%s1 + $0x50] sm:$0xff]
    %v57 = vld [vmem:[%s1 + $0x58] sm:$0xff]
    %v58 = vld [vmem:[%s1 + $0x60] sm:$0xff]
    %v59 = vld [vmem:[%s1 + $0x68] sm:$0xff]
    %v60 = vld [vmem:[%s1 + $0x70] sm:$0xff]
    %v61 = vld [vmem:[%s1 + $0x78] sm:$0xff]
    %v62 = vld [vmem:[%s3] sm:$0xf]
    %vm63 = vcmask 31744
    %v65 = vsel %vm63, %v46, 0
    %v68 = vsel %vm63, %v47, 0
    %v71 = vsel %vm63, %v48, 0
    %v74 = vsel %vm63, %v49, 0
    %v77 = vsel %vm63, %v50, 0
    %v80 = vsel %vm63, %v51, 0
    %v83 = vsel %vm63, %v52, 0
    %v86 = vsel %vm63, %v53, 0
    %v89 = vsel %vm63, %v54, 0
    %v92 = vsel %vm63, %v55, 0
    %v95 = vsel %vm63, %v56, 0
    %v98 = vsel %vm63, %v57, 0
    %v101 = vsel %vm63, %v58, 0
    %v104 = vsel %vm63, %v59, 0
    %v107 = vsel %vm63, %v60, 0
    %v110 = vsel %vm63, %v61, 0
    %vm112 = vcmask 1043456
    %v114 = vsel %vm112, %v62, 0
    %116 = vmatprep.subr.mxu0 0.0
    %117 = vmatpush1.msra.mxu0 %v114
    %118 = vmatprep.subr.mxu0 0.0
    %119 = vmatpush1.msra.mxu0 0.0
    %120 = vmatprep.subr.mxu0 0.0
    %121 = vmatpush1.msra.mxu0 0.0
    %122 = vmatprep.subr.mxu0 0.0
    %123 = vmatpush1.msra.mxu0 0.0
    %124 = vmatprep.subr.mxu0 0.0
    %125 = vmatpush1.msra.mxu0 0.0
    %126 = vmatprep.subr.mxu0 0.0
    %127 = vmatpush1.msra.mxu0 0.0
    %128 = vmatprep.subr.mxu0 0.0
    %129 = vmatpush1.msra.mxu0 0.0
    %130 = vmatprep.subr.mxu0 0.0
    %131 = vmatpush1.msra.mxu0 0.0
    %132 = vmatprep.subr.mxu0 0.0
    %133 = vmatpush1.msra.mxu0 0.0
    %134 = vmatprep.subr.mxu0 0.0
    %135 = vmatpush1.msra.mxu0 0.0
    %136 = vmatprep.subr.mxu0 0.0
    %137 = vmatpush1.msra.mxu0 0.0
    %138 = vmatprep.subr.mxu0 0.0
    %139 = vmatpush1.msra.mxu0 0.0
    %140 = vmatprep.subr.mxu0 0.0
    %141 = vmatpush1.msra.mxu0 0.0
    %142 = vmatprep.subr.mxu0 0.0
    %143 = vmatpush1.msra.mxu0 0.0
    %144 = vmatprep.subr.mxu0 0.0
    %145 = vmatpush1.msra.mxu0 0.0
    %146 = vmatprep.subr.mxu0 0.0
    %147 = vmatpush1.msra.mxu0 0.0
    %148 = vmatprep.subr.mxu0 0.0
    %149 = vmatpush1.msra.mxu0 0.0
    %150 = vmatprep.subr.mxu0 0.0
    %151 = vmatpush1.msra.mxu0 0.0
    %152 = vmatprep.subr.mxu0 0.0
    %153 = vmatpush1.msra.mxu0 0.0
    %154 = vmatprep.subr.mxu0 0.0
    %155 = vmatpush1.msra.mxu0 0.0
    %156 = vmatprep.subr.mxu0 0.0
    %157 = vmatpush1.msra.mxu0 0.0
    %158 = vmatprep.subr.mxu0 0.0
    %159 = vmatpush1.msra.mxu0 0.0
    %160 = vmatprep.subr.mxu0 0.0
    %161 = vmatpush1.msra.mxu0 0.0
    %162 = vmatprep.subr.mxu0 0.0
    %163 = vmatpush1.msra.mxu0 0.0
    %164 = vmatprep.subr.mxu0 0.0
    %165 = vmatpush1.msra.mxu0 0.0
    %166 = vmatprep.subr.mxu0 0.0
    %167 = vmatpush1.msra.mxu0 0.0
    %168 = vmatprep.subr.mxu0 0.0
    %169 = vmatpush1.msra.mxu0 0.0
    %170 = vmatprep.subr.mxu0 0.0
    %171 = vmatpush1.msra.mxu0 0.0
    %172 = vmatprep.subr.mxu0 0.0
    %173 = vmatpush1.msra.mxu0 0.0
    %174 = vmatprep.subr.mxu0 0.0
    %175 = vmatpush1.msra.mxu0 0.0
    %176 = vmatprep.subr.mxu0 0.0
    %177 = vmatpush1.msra.mxu0 0.0
    %178 = vmatprep.subr.mxu0 0.0
    %179 = vmatpush1.msra.mxu0 0.0
    %180 = vmatprep.mubr.f32.mxu0 0.0
    %181 = vmatmul.mubr.f32.gmra.mrb[0].mxu0 %v65
    %v182 = vpop.f32.mrb[0].mxu0
    %v183 = vadd.f32 0.0, %v182
    %v184 = vpop.f32.mrb[0].mxu0
    %185 = vmatprep.mubr.f32.mxu0 0.0
    %186 = vmatmul.mubr.f32.gmra.mrb[0].mxu0 %v68
    %v187 = vpop.f32.mrb[0].mxu0
    %v188 = vadd.f32 0.0, %v187
    %v189 = vpop.f32.mrb[0].mxu0
    %190 = vmatprep.mubr.f32.mxu0 0.0
    %191 = vmatmul.mubr.f32.gmra.mrb[0].mxu0 %v71
    %v192 = vpop.f32.mrb[0].mxu0
    %v193 = vadd.f32 0.0, %v192
    %v194 = vpop.f32.mrb[0].mxu0
    %195 = vmatprep.mubr.f32.mxu0 0.0
    %196 = vmatmul.mubr.f32.gmra.mrb[0].mxu0 %v74
    %v197 = vpop.f32.mrb[0].mxu0
    %v198 = vadd.f32 0.0, %v197
    %v199 = vpop.f32.mrb[0].mxu0
    %200 = vmatprep.mubr.f32.mxu0 0.0
    %201 = vmatmul.mubr.f32.gmra.mrb[0].mxu0 %v77
    %v202 = vpop.f32.mrb[0].mxu0
    %v203 = vadd.f32 0.0, %v202
    %v204 = vpop.f32.mrb[0].mxu0
    %205 = vmatprep.mubr.f32.mxu0 0.0
    %206 = vmatmul.mubr.f32.gmra.mrb[0].mxu0 %v80
    %v207 = vpop.f32.mrb[0].mxu0
    %v208 = vadd.f32 0.0, %v207
    %v209 = vpop.f32.mrb[0].mxu0
    %210 = vmatprep.mubr.f32.mxu0 0.0
    %211 = vmatmul.mubr.f32.gmra.mrb[0].mxu0 %v83
    %v212 = vpop.f32.mrb[0].mxu0
    %v213 = vadd.f32 0.0, %v212
    %v214 = vpop.f32.mrb[0].mxu0
    %215 = vmatprep.mubr.f32.mxu0 0.0
    %216 = vmatmul.mubr.f32.gmra.mrb[0].mxu0 %v86
    %v217 = vpop.f32.mrb[0].mxu0
    %v218 = vadd.f32 0.0, %v217
    %v219 = vpop.f32.mrb[0].mxu0
    %220 = vmatprep.mubr.f32.mxu0 0.0
    %221 = vmatmul.mubr.f32.gmra.mrb[0].mxu0 %v89
    %v222 = vpop.f32.mrb[0].mxu0
    %v223 = vadd.f32 0.0, %v222
    %v224 = vpop.f32.mrb[0].mxu0
    %225 = vmatprep.mubr.f32.mxu0 0.0
    %226 = vmatmul.mubr.f32.gmra.mrb[0].mxu0 %v92
    %v227 = vpop.f32.mrb[0].mxu0
    %v228 = vadd.f32 0.0, %v227
    %v229 = vpop.f32.mrb[0].mxu0
    %230 = vmatprep.mubr.f32.mxu0 0.0
    %231 = vmatmul.mubr.f32.gmra.mrb[0].mxu0 %v95
    %v232 = vpop.f32.mrb[0].mxu0
    %v233 = vadd.f32 0.0, %v232
    %v234 = vpop.f32.mrb[0].mxu0
    %235 = vmatprep.mubr.f32.mxu0 0.0
    %236 = vmatmul.mubr.f32.gmra.mrb[0].mxu0 %v98
    %v237 = vpop.f32.mrb[0].mxu0
    %v238 = vadd.f32 0.0, %v237
    %v239 = vpop.f32.mrb[0].mxu0
    %240 = vmatprep.mubr.f32.mxu0 0.0
    %241 = vmatmul.mubr.f32.gmra.mrb[0].mxu0 %v101
    %v242 = vpop.f32.mrb[0].mxu0
    %v243 = vadd.f32 0.0, %v242
    %v244 = vpop.f32.mrb[0].mxu0
    %245 = vmatprep.mubr.f32.mxu0 0.0
    %246 = vmatmul.mubr.f32.gmra.mrb[0].mxu0 %v104
    %v247 = vpop.f32.mrb[0].mxu0
    %v248 = vadd.f32 0.0, %v247
    %v249 = vpop.f32.mrb[0].mxu0
    %250 = vmatprep.mubr.f32.mxu0 0.0
    %251 = vmatmul.mubr.f32.gmra.mrb[0].mxu0 %v107
    %v252 = vpop.f32.mrb[0].mxu0
    %v253 = vadd.f32 0.0, %v252
    %v254 = vpop.f32.mrb[0].mxu0
    %255 = vmatprep.mubr.f32.mxu0 0.0
    %256 = vmatmul.mubr.f32.gmra.mrb[0].mxu0 %v110
    %v257 = vpop.f32.mrb[0].mxu0
    %v258 = vadd.f32 0.0, %v257
    %v259 = vpop.f32.mrb[0].mxu0
    %260 = vdwg.mxu0
    %vm261 = vcmask 97280
    %v263 = vsel %vm261, %v28, 0
    %v266 = vsel %vm261, %v29, 0
    %v269 = vsel %vm261, %v30, 0
    %v272 = vsel %vm261, %v31, 0
    %v275 = vsel %vm261, %v32, 0
    %v278 = vsel %vm261, %v33, 0
    %v281 = vsel %vm261, %v34, 0
    %v284 = vsel %vm261, %v35, 0
    %v287 = vsel %vm261, %v36, 0
    %v290 = vsel %vm261, %v37, 0
    %v293 = vsel %vm261, %v38, 0
    %v296 = vsel %vm261, %v39, 0
    %v299 = vsel %vm261, %v40, 0
    %v302 = vsel %vm261, %v41, 0
    %v305 = vsel %vm261, %v42, 0
    %v308 = vsel %vm261, %v43, 0
    %v311 = vsel %vm112, %v45, 0
    %313 = vmatprep.subr.mxu0 0.0
    %314 = vmatpush1.msra.mxu0 %v44
    %315 = vmatprep.subr.mxu0 0.0
    %316 = vmatpush1.msra.mxu0 %v311
    %317 = vmatprep.subr.mxu0 0.0
    %318 = vmatpush1.msra.mxu0 0.0
    %319 = vmatprep.subr.mxu0 0.0
    %320 = vmatpush1.msra.mxu0 0.0
    %321 = vmatprep.subr.mxu0 0.0
    %322 = vmatpush1.msra.mxu0 0.0
    %323 = vmatprep.subr.mxu0 0.0
    %324 = vmatpush1.msra.mxu0 0.0
    %325 = vmatprep.subr.mxu0 0.0
    %326 = vmatpush1.msra.mxu0 0.0
    %327 = vmatprep.subr.mxu0 0.0
    %328 = vmatpush1.msra.mxu0 0.0
    %329 = vmatprep.subr.mxu0 0.0
    %330 = vmatpush1.msra.mxu0 0.0
    %331 = vmatprep.subr.mxu0 0.0
    %332 = vmatpush1.msra.mxu0 0.0
    %333 = vmatprep.subr.mxu0 0.0
    %334 = vmatpush1.msra.mxu0 0.0
    %335 = vmatprep.subr.mxu0 0.0
    %336 = vmatpush1.msra.mxu0 0.0
    %337 = vmatprep.subr.mxu0 0.0
    %338 = vmatpush1.msra.mxu0 0.0
    %339 = vmatprep.subr.mxu0 0.0
    %340 = vmatpush1.msra.mxu0 0.0
    %341 = vmatprep.subr.mxu0 0.0
    %342 = vmatpush1.msra.mxu0 0.0
    %343 = vmatprep.subr.mxu0 0.0
    %344 = vmatpush1.msra.mxu0 0.0
    %345 = vmatprep.subr.mxu0 0.0
    %346 = vmatpush1.msra.mxu0 0.0
    %347 = vmatprep.subr.mxu0 0.0
    %348 = vmatpush1.msra.mxu0 0.0
    %349 = vmatprep.subr.mxu0 0.0
    %350 = vmatpush1.msra.mxu0 0.0
    %351 = vmatprep.subr.mxu0 0.0
    %352 = vmatpush1.msra.mxu0 0.0
    %353 = vmatprep.subr.mxu0 0.0
    %354 = vmatpush1.msra.mxu0 0.0
    %355 = vmatprep.subr.mxu0 0.0
    %356 = vmatpush1.msra.mxu0 0.0
    %357 = vmatprep.subr.mxu0 0.0
    %358 = vmatpush1.msra.mxu0 0.0
    %359 = vmatprep.subr.mxu0 0.0
    %360 = vmatpush1.msra.mxu0 0.0
    %361 = vmatprep.subr.mxu0 0.0
    %362 = vmatpush1.msra.mxu0 0.0
    %363 = vmatprep.subr.mxu0 0.0
    %364 = vmatpush1.msra.mxu0 0.0
    %365 = vmatprep.subr.mxu0 0.0
    %366 = vmatpush1.msra.mxu0 0.0
    %367 = vmatprep.subr.mxu0 0.0
    %368 = vmatpush1.msra.mxu0 0.0
    %369 = vmatprep.subr.mxu0 0.0
    %370 = vmatpush1.msra.mxu0 0.0
    %371 = vmatprep.subr.mxu0 0.0
    %372 = vmatpush1.msra.mxu0 0.0
    %373 = vmatprep.subr.mxu0 0.0
    %374 = vmatpush1.msra.mxu0 0.0
    %375 = vmatprep.subr.mxu0 0.0
    %376 = vmatpush1.msra.mxu0 0.0
    %377 = vmatprep.mubr.f32.mxu0 0.0
    %378 = vmatmul.mubr.f32.gmra.mrb[0].mxu0 %v263
    %v379 = vpop.f32.mrb[0].mxu0
    %v380 = vadd.f32 %v183, %v379
    %v381 = vpop.f32.mrb[0].mxu0
    %382 = vmatprep.mubr.f32.mxu0 0.0
    %383 = vmatmul.mubr.f32.gmra.mrb[0].mxu0 %v266
    %v384 = vpop.f32.mrb[0].mxu0
    %v385 = vadd.f32 %v188, %v384
    %v386 = vpop.f32.mrb[0].mxu0
    %387 = vmatprep.mubr.f32.mxu0 0.0
    %388 = vmatmul.mubr.f32.gmra.mrb[0].mxu0 %v269
    %v389 = vpop.f32.mrb[0].mxu0
    %v390 = vadd.f32 %v193, %v389
    %v391 = vpop.f32.mrb[0].mxu0
    %392 = vmatprep.mubr.f32.mxu0 0.0
    %393 = vmatmul.mubr.f32.gmra.mrb[0].mxu0 %v272
    %v394 = vpop.f32.mrb[0].mxu0
    %v395 = vadd.f32 %v198, %v394
    %v396 = vpop.f32.mrb[0].mxu0
    %397 = vmatprep.mubr.f32.mxu0 0.0
    %398 = vmatmul.mubr.f32.gmra.mrb[0].mxu0 %v275
    %v399 = vpop.f32.mrb[0].mxu0
    %v400 = vadd.f32 %v203, %v399
    %v401 = vpop.f32.mrb[0].mxu0
    %402 = vmatprep.mubr.f32.mxu0 0.0
    %403 = vmatmul.mubr.f32.gmra.mrb[0].mxu0 %v278
    %v404 = vpop.f32.mrb[0].mxu0
    %v405 = vadd.f32 %v208, %v404
    %v406 = vpop.f32.mrb[0].mxu0
    %407 = vmatprep.mubr.f32.mxu0 0.0
    %408 = vmatmul.mubr.f32.gmra.mrb[0].mxu0 %v281
    %v409 = vpop.f32.mrb[0].mxu0
    %v410 = vadd.f32 %v213, %v409
    %v411 = vpop.f32.mrb[0].mxu0
    %412 = vmatprep.mubr.f32.mxu0 0.0
    %413 = vmatmul.mubr.f32.gmra.mrb[0].mxu0 %v284
    %v414 = vpop.f32.mrb[0].mxu0
    %v415 = vadd.f32 %v218, %v414
    %v416 = vpop.f32.mrb[0].mxu0
    %417 = vmatprep.mubr.f32.mxu0 0.0
    %418 = vmatmul.mubr.f32.gmra.mrb[0].mxu0 %v287
    %v419 = vpop.f32.mrb[0].mxu0
    %v420 = vadd.f32 %v223, %v419
    %v421 = vpop.f32.mrb[0].mxu0
    %422 = vmatprep.mubr.f32.mxu0 0.0
    %423 = vmatmul.mubr.f32.gmra.mrb[0].mxu0 %v290
    %v424 = vpop.f32.mrb[0].mxu0
    %v425 = vadd.f32 %v228, %v424
    %v426 = vpop.f32.mrb[0].mxu0
    %427 = vmatprep.mubr.f32.mxu0 0.0
    %428 = vmatmul.mubr.f32.gmra.mrb[0].mxu0 %v293
    %v429 = vpop.f32.mrb[0].mxu0
    %v430 = vadd.f32 %v233, %v429
    %v431 = vpop.f32.mrb[0].mxu0
    %432 = vmatprep.mubr.f32.mxu0 0.0
    %433 = vmatmul.mubr.f32.gmra.mrb[0].mxu0 %v296
    %v434 = vpop.f32.mrb[0].mxu0
    %v435 = vadd.f32 %v238, %v434
    %v436 = vpop.f32.mrb[0].mxu0
    %437 = vmatprep.mubr.f32.mxu0 0.0
    %438 = vmatmul.mubr.f32.gmra.mrb[0].mxu0 %v299
    %v439 = vpop.f32.mrb[0].mxu0
    %v440 = vadd.f32 %v243, %v439
    %v441 = vpop.f32.mrb[0].mxu0
    %442 = vmatprep.mubr.f32.mxu0 0.0
    %443 = vmatmul.mubr.f32.gmra.mrb[0].mxu0 %v302
    %v444 = vpop.f32.mrb[0].mxu0
    %v445 = vadd.f32 %v248, %v444
    %v446 = vpop.f32.mrb[0].mxu0
    %447 = vmatprep.mubr.f32.mxu0 0.0
    %448 = vmatmul.mubr.f32.gmra.mrb[0].mxu0 %v305
    %v449 = vpop.f32.mrb[0].mxu0
    %v450 = vadd.f32 %v253, %v449
    %v451 = vpop.f32.mrb[0].mxu0
    %452 = vmatprep.mubr.f32.mxu0 0.0
    %453 = vmatmul.mubr.f32.gmra.mrb[0].mxu0 %v308
    %v454 = vpop.f32.mrb[0].mxu0
    %v455 = vadd.f32 %v258, %v454
    %v456 = vpop.f32.mrb[0].mxu0
    %457 = vdwg.mxu0
    %v458 = vld [vmem:[%s4] sm:$0x1]
    %v460 = vlaneseq
    %v461 = vshrl.u32 %v460, 7
    %v462 = vsub.s32 0, %v461
    %v463 = vrot.slane %v458, %v462
    %v465 = vadd.f32 %v380, %v463
    %v466 = vadd.f32 %v385, %v463
    %v467 = vadd.f32 %v390, %v463
    %v468 = vadd.f32 %v395, %v463
    %v469 = vadd.f32 %v400, %v463
    %v470 = vadd.f32 %v405, %v463
    %v471 = vadd.f32 %v410, %v463
    %v472 = vadd.f32 %v415, %v463
    %v473 = vadd.f32 %v420, %v463
    %v474 = vadd.f32 %v425, %v463
    %v475 = vadd.f32 %v430, %v463
    %v476 = vadd.f32 %v435, %v463
    %v477 = vadd.f32 %v440, %v463
    %v478 = vadd.f32 %v445, %v463
    %v479 = vadd.f32 %v450, %v463
    %v480 = vadd.f32 %v455, %v463
    %v481 = vmax.f32 %v465, 0.0
    %v482 = vmax.f32 %v466, 0.0
    %v483 = vmax.f32 %v467, 0.0
    %v484 = vmax.f32 %v468, 0.0
    %v485 = vmax.f32 %v469, 0.0
    %v486 = vmax.f32 %v470, 0.0
    %v487 = vmax.f32 %v471, 0.0
    %v488 = vmax.f32 %v472, 0.0
    %v489 = vmax.f32 %v473, 0.0
    %v490 = vmax.f32 %v474, 0.0
    %v491 = vmax.f32 %v475, 0.0
    %v492 = vmax.f32 %v476, 0.0
    %v493 = vmax.f32 %v477, 0.0
    %v494 = vmax.f32 %v478, 0.0
    %v495 = vmax.f32 %v479, 0.0
    %v496 = vmax.f32 %v480, 0.0
    %v497 = vld [vmem:[%s5] sm:$0x1]
    %s498 = sld [smem:[#allocation2]]
    %v499 = vstv %s498
    %vm500 = vcmask 261120
    %v502 = vsel %vm500, %v497, 0
    %v505 = vsel %vm500, %v481, 0
    %v508 = vsel %vm500, %v482, 0
    %v511 = vsel %vm500, %v483, 0
    %v514 = vsel %vm500, %v484, 0
    %v517 = vsel %vm500, %v485, 0
    %v520 = vsel %vm500, %v486, 0
    %v523 = vsel %vm500, %v487, 0
    %v526 = vsel %vm500, %v488, 0
    %v529 = vsel %vm500, %v489, 0
    %v532 = vsel %vm500, %v490, 0
    %v535 = vsel %vm500, %v491, 0
    %v538 = vsel %vm500, %v492, 0
    %v541 = vsel %vm500, %v493, 0
    %v544 = vsel %vm500, %v494, 0
    %v547 = vsel %vm500, %v495, 0
    %v550 = vsel %vm500, %v496, 0
    %552 = vmatprep.subr.mxu0 0.0
    %553 = vmatpush1.xpose.msra.mxu0 %v505
    %554 = vmatprep.subr.mxu0 0.0
    %555 = vmatpush1.xpose.msra.mxu0 %v508
    %556 = vmatprep.subr.mxu0 0.0
    %557 = vmatpush1.xpose.msra.mxu0 %v511
    %558 = vmatprep.subr.mxu0 0.0
    %559 = vmatpush1.xpose.msra.mxu0 %v514
    %560 = vmatprep.subr.mxu0 0.0
    %561 = vmatpush1.xpose.msra.mxu0 %v517
    %562 = vmatprep.subr.mxu0 0.0
    %563 = vmatpush1.xpose.msra.mxu0 %v520
    %564 = vmatprep.subr.mxu0 0.0
    %565 = vmatpush1.xpose.msra.mxu0 %v523
    %566 = vmatprep.subr.mxu0 0.0
    %567 = vmatpush1.xpose.msra.mxu0 %v526
    %568 = vmatprep.subr.mxu0 0.0
    %569 = vmatpush1.xpose.msra.mxu0 %v529
    %570 = vmatprep.subr.mxu0 0.0
    %571 = vmatpush1.xpose.msra.mxu0 %v532
    %572 = vmatprep.subr.mxu0 0.0
    %573 = vmatpush1.xpose.msra.mxu0 %v535
    %574 = vmatprep.subr.mxu0 0.0
    %575 = vmatpush1.xpose.msra.mxu0 %v538
    %576 = vmatprep.subr.mxu0 0.0
    %577 = vmatpush1.xpose.msra.mxu0 %v541
    %578 = vmatprep.subr.mxu0 0.0
    %579 = vmatpush1.xpose.msra.mxu0 %v544
    %580 = vmatprep.subr.mxu0 0.0
    %581 = vmatpush1.xpose.msra.mxu0 %v547
    %582 = vmatprep.subr.mxu0 0.0
    %583 = vmatpush1.xpose.msra.mxu0 %v550
    %584 = vmatprep.subr.mxu0 0.0
    %585 = vmatpush1.xpose.msra.mxu0 0.0
    %586 = vmatprep.subr.mxu0 0.0
    %587 = vmatpush1.xpose.msra.mxu0 0.0
    %588 = vmatprep.subr.mxu0 0.0
    %589 = vmatpush1.xpose.msra.mxu0 0.0
    %590 = vmatprep.subr.mxu0 0.0
    %591 = vmatpush1.xpose.msra.mxu0 0.0
    %592 = vmatprep.subr.mxu0 0.0
    %593 = vmatpush1.xpose.msra.mxu0 0.0
    %594 = vmatprep.subr.mxu0 0.0
    %595 = vmatpush1.xpose.msra.mxu0 0.0
    %596 = vmatprep.subr.mxu0 0.0
    %597 = vmatpush1.xpose.msra.mxu0 0.0
    %598 = vmatprep.subr.mxu0 0.0
    %599 = vmatpush1.xpose.msra.mxu0 0.0
    %600 = vmatprep.subr.mxu0 0.0
    %601 = vmatpush1.xpose.msra.mxu0 0.0
    %602 = vmatprep.subr.mxu0 0.0
    %603 = vmatpush1.xpose.msra.mxu0 0.0
    %604 = vmatprep.subr.mxu0 0.0
    %605 = vmatpush1.xpose.msra.mxu0 0.0
    %606 = vmatprep.subr.mxu0 0.0
    %607 = vmatpush1.xpose.msra.mxu0 0.0
    %608 = vmatprep.subr.mxu0 0.0
    %609 = vmatpush1.xpose.msra.mxu0 0.0
    %610 = vmatprep.subr.mxu0 0.0
    %611 = vmatpush1.xpose.msra.mxu0 0.0
    %612 = vmatprep.subr.mxu0 0.0
    %613 = vmatpush1.xpose.msra.mxu0 0.0
    %614 = vmatprep.subr.mxu0 0.0
    %615 = vmatpush1.xpose.msra.mxu0 0.0
    %616 = vmatprep.mubr.f32.mxu0 0.0
    %617 = vmatmul.mubr.f32.gmra.mrb[0].mxu0 %v502
    %v618 = vpop.f32.mrb[0].mxu0
    %v619 = vadd.f32 %v499, %v618
    %v620 = vpop.f32.mrb[0].mxu0
    %621 = vdwg.mxu0
    %v622 = vxor.u32 %v619, 2147483648
    %v623 = vmul.f32 %v622, 1.442695
    %v624 = vpow.pop %v623
    %v625 = vadd.f32 %v624, 1.0
    %v626 = vrcp.pop %v625
    %v627 = vmul.f32 1.0, %v626
    %628 = vst [vmem:[#allocation3] sm:$0x1] %v627
    // Predicated region
    $region30: #{tpu_custom_call.1} parent=1 // pred_check
      _
    $region31: #{tpu_custom_call.1} parent=1 // pred_check_branch
      %630 = sbr.rel (0) target = $region33
    $region32: #{tpu_custom_call.1} parent=1 // pred_region
      %s632 = ssub.s32 16, 16
      %633 = vsyncadd [#allocation4], %s632
      %s635 = sshll.u32 [#allocation3], 4
      %s636 = int_to_ptr.vmem [resolvable:$true] %s635
      %638 = dma.vmem_to_hbm [thread:$0]  %s636, 16, %s7, [#allocation4]
    $region33: #{tpu_custom_call.1} parent=1 // pred_fallthru
      _
    // Predicated region
    $region34: #{tpu_custom_call.1} parent=1 // pred_check
      _
    $region35: #{tpu_custom_call.1} parent=1 // pred_check_branch
      %640 = sbr.rel (0) target = $region37
    $region36: #{tpu_custom_call.1} parent=1 // pred_region
      %641 = dma.done [#allocation4], 16
    $region37: #{tpu_custom_call.1} parent=1 // pred_fallthru
      _
    %642 = vsyncpa [#allocation4], 1

</llo_original>
